<compile_context>
chip_gen: v6e
topology: v6e:2x2x1
jax: 0.10.0
libtpu: 0.0.40
codegen_flags: <defaults>
</compile_context>

<pallas_src>
import functools
import math

import jax
import jax.numpy as jnp
from jax.experimental import pallas as pl
from jax.experimental.pallas import tpu as pltpu

LN_EPS = 1e-12  # ViTConfig.layer_norm_eps default


def _round_up(x, m):
    return (x + m - 1) // m * m


def _layernorm(x, gamma, beta):
    x = x.astype(jnp.float32)
    mean = jnp.mean(x, axis=-1, keepdims=True)
    var = jnp.mean((x - mean) ** 2, axis=-1, keepdims=True)
    return (x - mean) * jax.lax.rsqrt(var + LN_EPS) * gamma + beta


# Layout-aware (sublane<->major) permutation helper for the head split/merge.
_EINSHAPE = getattr(pltpu, "einshape", None)


def _split_heads(t, nh, hd):
    """(S, nh*hd) -> (nh, S, hd): heads on a leading batch axis for batched matmuls."""
    s = t.shape[0]
    t = t.reshape(s, nh, hd)
    if _EINSHAPE is not None:
        return _EINSHAPE("shd->hsd", t)
    return jnp.swapaxes(t, 0, 1)


def _merge_heads(t):
    """(nh, S, hd) -> (S, nh*hd)."""
    nh, s, hd = t.shape
    t = _EINSHAPE("hsd->shd", t) if _EINSHAPE is not None else jnp.swapaxes(t, 0, 1)
    return t.reshape(s, nh * hd)


# ----------------------------------------------------------------------------
# Kernel 1: patch embedding (Conv2d with kernel=stride=patch  ==  tiled matmul)
# ----------------------------------------------------------------------------
def patch_embed_kernel(p_ref, w_ref, b_ref, o_ref):
    o_ref[...] = (
        jnp.dot(p_ref[...], w_ref[...], preferred_element_type=jnp.float32)
        + b_ref[...]
    ).astype(o_ref.dtype)


def patch_embed(patches, w, b):
    M, K = patches.shape
    H = w.shape[1]
    tm = 256 if M >= 256 else _round_up(M, 8)
    Mp = _round_up(M, tm)
    if Mp != M:
        patches = jnp.pad(patches, ((0, Mp - M), (0, 0)))
    out = pl.pallas_call(
        patch_embed_kernel,
        out_shape=jax.ShapeDtypeStruct((Mp, H), jnp.float32),
        grid=(Mp // tm,),
        in_specs=[
            pl.BlockSpec((tm, K), lambda i: (i, 0)),
            pl.BlockSpec((K, H), lambda i: (0, 0)),
            pl.BlockSpec((1, H), lambda i: (0, 0)),
        ],
        out_specs=pl.BlockSpec((tm, H), lambda i: (i, 0)),
        compiler_params=pltpu.CompilerParams(dimension_semantics=("parallel",)),
    )(patches, w, b)
    return out[:M] if Mp != M else out


# ----------------------------------------------------------------------------
# Kernel 2: full ViT encoder.  grid=(B, L); activation stays resident in the
# output VMEM block across the layer axis; weights are streamed per layer.
# ----------------------------------------------------------------------------
def vit_encoder_kernel(
    x_ref,
    ln1_g, ln1_b, wqkv, bqkv, wo, bo,
    ln2_g, ln2_b, wi, bi, wout, bout,
    o_ref,
    *, num_heads, valid_len,
):
    # Layer index is the innermost ('arbitrary') grid axis: the output block is
    # resident in VMEM across it and is used as the activation carry.
    @pl.when(pl.program_id(1) == 0)
    def _():
        o_ref[...] = x_ref[...]

    x = o_ref[0].astype(jnp.float32)                      # (S, H)
    S, H = x.shape
    nh = num_heads
    hd = H // nh
    scale = 1.0 / math.sqrt(hd)

    # --- attention (pre-LN), fused QKV projection, heads batched on lead axis ---
    ln1 = _layernorm(x, ln1_g[0], ln1_b[0])
    qkv = jnp.dot(ln1.astype(jnp.bfloat16), wqkv[0],
                  preferred_element_type=jnp.float32) + bqkv[0]      # (S, 3H)
    q = qkv[:, :H] * scale
    k = qkv[:, H:2 * H]
    v = qkv[:, 2 * H:]

    qh = _split_heads(q, nh, hd).astype(jnp.bfloat16)                # (nh, S, hd)
    kh = _split_heads(k, nh, hd).astype(jnp.bfloat16)
    vh = _split_heads(v, nh, hd).astype(jnp.bfloat16)

    s = jnp.einsum("hqd,hkd->hqk", qh, kh,
                   preferred_element_type=jnp.float32)               # (nh, S, S)
    if valid_len < S:  # static: mask padded key columns
        col = jax.lax.broadcasted_iota(jnp.int32, (1, 1, S), 2)
        s = s + jnp.where(col < valid_len, jnp.float32(0.0), jnp.float32(-1e30))
    s = s - jnp.max(s, axis=-1, keepdims=True)
    e = jnp.exp(s)
    p = e * pl.reciprocal(jnp.sum(e, axis=-1, keepdims=True), approx=True)
    ctx = jnp.einsum("hqk,hkd->hqd", p.astype(jnp.bfloat16), vh,
                     preferred_element_type=jnp.float32)             # (nh, S, hd)
    ctx = _merge_heads(ctx)                                          # (S, H)

    attn = jnp.dot(ctx.astype(jnp.bfloat16), wo[0],
                   preferred_element_type=jnp.float32) + bo[0]
    x = x + attn                                                     # residual

    # --- MLP (pre-LN) ---
    ln2 = _layernorm(x, ln2_g[0], ln2_b[0])
    h1 = jnp.dot(ln2.astype(jnp.bfloat16), wi[0],
                 preferred_element_type=jnp.float32) + bi[0]
    h1 = jax.nn.gelu(h1, approximate=False)   # exact erf GELU as in HF ViT
    h2 = jnp.dot(h1.astype(jnp.bfloat16), wout[0],
                 preferred_element_type=jnp.float32) + bout[0]

    o_ref[0] = (x + h2).astype(o_ref.dtype)                          # residual


def _encoder_vmem_limit(S, H, I, nh):
    wbytes = 2 * (3 * H * H + H * H + 2 * H * I)        # bf16 weight blocks
    small = 4 * (3 * H + 3 * H + I + 4 * H)             # f32 biases + LN params
    act = 2 * 2 * (S * H)                               # bf16 in/out activation blocks
    temps = 4 * (3 * S * H + 2 * nh * S * S + 2 * S * I + 6 * S * H)
    need = 2 * (wbytes + small + act) + temps           # x2: double-buffered pipeline
    return int(min(max(need, 8 << 20), 64 << 20))


def vit_encoder(x, enc, num_heads, valid_len):
    B, S, H = x.shape
    L = enc["wqkv"].shape[0]
    I = enc["wi"].shape[2]

    x_spec = pl.BlockSpec((1, S, H), lambda b, l: (b, 0, 0))

    def wspec(r, c):
        return pl.BlockSpec((1, r, c), lambda b, l: (l, 0, 0))

    in_specs = [
        x_spec,
        wspec(1, H), wspec(1, H),                  # ln1
        wspec(H, 3 * H), wspec(1, 3 * H),          # fused qkv
        wspec(H, H), wspec(1, H),                  # attn out proj
        wspec(1, H), wspec(1, H),                  # ln2
        wspec(H, I), wspec(1, I),                  # mlp in
        wspec(I, H), wspec(1, H),                  # mlp out
    ]

    kernel = functools.partial(
        vit_encoder_kernel, num_heads=num_heads, valid_len=valid_len)
    return pl.pallas_call(
        kernel,
        out_shape=jax.ShapeDtypeStruct((B, S, H), x.dtype),
        grid=(B, L),
        in_specs=in_specs,
        out_specs=x_spec,
        compiler_params=pltpu.CompilerParams(
            dimension_semantics=("parallel", "arbitrary"),
            vmem_limit_bytes=_encoder_vmem_limit(S, H, I, num_heads),
        ),
    )(x, enc["ln1_g"], enc["ln1_b"], enc["wqkv"], enc["bqkv"],
      enc["wo"], enc["bo"], enc["ln2_g"], enc["ln2_b"],
      enc["wi"], enc["bi"], enc["wout"], enc["bout"])


# ----------------------------------------------------------------------------
# Kernel 3: pooler (CLS dense + tanh) and layernorm + soft-token average pool.
# Only the first few sequence rows are ever DMA'd into VMEM.
# ----------------------------------------------------------------------------
def head_kernel(x_ref, lng_ref, lnb_ref, wp_ref, bp_ref,
                soft_ref, pool_ref, *, soft_tokens):
    x = x_ref[...].astype(jnp.float32)           # (B, HR, H), HR >= 1 + soft_tokens
    # Module calls visual_plm.encoder(...) directly, so the pooler sees the raw
    # encoder output (pre-final-layernorm CLS) -- faithful to the reference.
    cls = x[:, 0, :]                             # (B, H)
    pool_ref[...] = jnp.tanh(
        jnp.dot(cls.astype(jnp.bfloat16), wp_ref[...],
                preferred_element_type=jnp.float32) + bp_ref[...])
    soft = x[:, 1:1 + soft_tokens, :]            # (B, ST, H)
    ln = _layernorm(soft, lng_ref[...], lnb_ref[...])
    # avg_pool1d(kernel=ST) over soft tokens == mean over the token axis
    soft_ref[...] = jnp.mean(ln, axis=1)


def head(x, ln_g, ln_b, wp, bp, soft_tokens):
    B, S, H = x.shape
    hr = min(_round_up(1 + soft_tokens, 16), S)  # only rows actually consumed
    return pl.pallas_call(
        functools.partial(head_kernel, soft_tokens=soft_tokens),
        out_shape=(jax.ShapeDtypeStruct((B, H), jnp.float32),
                   jax.ShapeDtypeStruct((B, H), jnp.float32)),
        grid=(1,),
        in_specs=[
            pl.BlockSpec((B, hr, H), lambda i: (0, 0, 0)),
            pl.BlockSpec((1, H), lambda i: (0, 0)),
            pl.BlockSpec((1, H), lambda i: (0, 0)),
            pl.BlockSpec((H, H), lambda i: (0, 0)),
            pl.BlockSpec((1, H), lambda i: (0, 0)),
        ],
        out_specs=(pl.BlockSpec((B, H), lambda i: (0, 0)),
                   pl.BlockSpec((B, H), lambda i: (0, 0))),
        compiler_params=pltpu.CompilerParams(dimension_semantics=("arbitrary",)),
    )(x, ln_g, ln_b, wp, bp)


# ----------------------------------------------------------------------------
# Parameter init (deterministic synthetic weights) and full forward
# ----------------------------------------------------------------------------
def init_params(key, cfg):
    C, p, H = cfg["num_channels"], cfg["patch_size"], cfg["hidden"]
    L, I, ST = cfg["layers"], cfg["intermediate"], cfg["soft_tokens"]
    N = (cfg["image"] // p) ** 2
    ks = jax.random.split(key, 12)

    def w(k, shape, scale=0.02):  # bf16 weights, halve HBM/VMEM traffic
        return (scale * jax.random.normal(k, shape, jnp.float32)).astype(jnp.bfloat16)

    def zeros(shape):
        return jnp.zeros(shape, jnp.float32)

    def ones(shape):
        return jnp.ones(shape, jnp.float32)

    val = math.sqrt(6.0 / float(H * 2))
    params = {
        "patch_w": w(ks[0], (C * p * p, H)),
        "patch_b": zeros((1, H)),
        "cls_token": 0.02 * jax.random.normal(ks[1], (1, 1, H), jnp.float32),
        "pos_embed": 0.02 * jax.random.normal(ks[2], (1, 1 + N, H), jnp.float32),
        # soft prompt: uniform(-val, val) with val = sqrt(6 / (hidden * 2))
        "soft_prompt": jax.random.uniform(
            ks[3], (1, ST, H), jnp.float32, minval=-val, maxval=val),
        "final_ln_g": ones((1, H)),
        "final_ln_b": zeros((1, H)),
        "pool_w": w(ks[4], (H, H)),
        "pool_b": zeros((1, H)),
        # per-layer weights stacked on a leading L axis (layer = grid axis)
        "enc": {
            "ln1_g": ones((L, 1, H)), "ln1_b": zeros((L, 1, H)),
            "wqkv": w(ks[5], (L, H, 3 * H)), "bqkv": zeros((L, 1, 3 * H)),
            "wo": w(ks[6], (L, H, H)), "bo": zeros((L, 1, H)),
            "ln2_g": ones((L, 1, H)), "ln2_b": zeros((L, 1, H)),
            "wi": w(ks[7], (L, H, I)), "bi": zeros((L, 1, I)),
            "wout": w(ks[8], (L, I, H)), "bout": zeros((L, 1, H)),
        },
    }
    return params


def tmpt_visual_forward(pixel_values, params, cfg):
    B, C, Hh, Ww = pixel_values.shape
    p = cfg["patch_size"]
    nH, nW = Hh // p, Ww // p
    N = nH * nW
    H = cfg["hidden"]
    ST = cfg["soft_tokens"]

    # --- embeddings: patchify (glue) + tiled Pallas matmul projection ---
    patches = (
        pixel_values.reshape(B, C, nH, p, nW, p)
        .transpose(0, 2, 4, 1, 3, 5)            # (B, nH, nW, C, p, p)
        .reshape(B * N, C * p * p)
        .astype(jnp.bfloat16)
    )
    pe = patch_embed(patches, params["patch_w"], params["patch_b"]).reshape(B, N, H)
    cls = jnp.broadcast_to(params["cls_token"], (B, 1, H))
    emb = jnp.concatenate([cls, pe], axis=1) + params["pos_embed"]   # (B, 1+N, H)

    # --- incorporate_prompt: insert soft tokens after CLS (dropout = eval id) ---
    # TODO(synk): training-mode soft_prompt_dropout (RNG Bernoulli mask) not implemented.
    soft = jnp.broadcast_to(params["soft_prompt"], (B, ST, H))
    x = jnp.concatenate([emb[:, :1, :], soft, emb[:, 1:, :]], axis=1)  # (B, 1+ST+N, H)

    # pad sequence to a multiple of 8 (padded key columns are masked in attention)
    s_valid = 1 + ST + N
    s_pad = _round_up(s_valid, 8)
    if s_pad != s_valid:
        x = jnp.pad(x, ((0, 0), (0, s_pad - s_valid), (0, 0)))
    x = x.astype(jnp.bfloat16)

    # --- encoder (all layers in one pallas_call, activation VMEM-resident) ---
    x = vit_encoder(x, params["enc"], cfg["heads"], s_valid)

    # --- pooler + final layernorm + soft-token average pool ---
    soft_hidden, pooled = head(
        x, params["final_ln_g"], params["final_ln_b"],
        params["pool_w"], params["pool_b"], ST)
    return {"last_hidden_state": soft_hidden, "pooler_output": pooled}


if __name__ == "__main__":
    cfg = dict(num_channels=3, image=16, patch_size=8, hidden=128,
               layers=2, heads=4, intermediate=256, soft_tokens=4)

    key = jax.random.PRNGKey(0)
    k_param, k_in = jax.random.split(key)
    params = init_params(k_param, cfg)

    pixel_values = jax.random.normal(
        k_in, (2, cfg["num_channels"], cfg["image"], cfg["image"]), jnp.float32)

    out = jax.block_until_ready(tmpt_visual_forward(pixel_values, params, cfg))

    assert out["last_hidden_state"].shape == (2, cfg["hidden"])
    assert out["pooler_output"].shape == (2, cfg["hidden"])
    assert jnp.all(jnp.isfinite(out["last_hidden_state"]))
    assert jnp.all(jnp.isfinite(out["pooler_output"]))
    print("KERNEL_OK")
</pallas_src>

<mosaic_0001>
module attributes {stable_mosaic.version = 11 : i64} {
  func.func @patch_embed_kernel(%arg0: i32, %arg1: memref<8x192xbf16, #tpu.memory_space<vmem>>, %arg2: memref<192x128xbf16, #tpu.memory_space<vmem>>, %arg3: memref<1x128xf32, #tpu.memory_space<vmem>>, %arg4: memref<8x128xf32, #tpu.memory_space<vmem>>) attributes {dimension_semantics = [#tpu.dimension_semantics<parallel>], iteration_bounds = array<i64: 1>, scalar_prefetch = 0 : i64, scratch_operands = 0 : i64, tpu.core_type = #tpu.core_type<tc>, window_params = [{transform_indices = @transform_0, window_bounds = array<i64: 8, 192>}, {pipeline_mode = #tpu.pipeline_mode<synchronous>, transform_indices = @transform_1, window_bounds = array<i64: 192, 128>}, {pipeline_mode = #tpu.pipeline_mode<synchronous>, transform_indices = @transform_2, window_bounds = array<i64: 1, 128>}, {transform_indices = @transform_3, window_bounds = array<i64: 8, 128>}]} {
    %c0 = arith.constant 0 : index
    %c0_0 = arith.constant 0 : index
    %0 = vector.load %arg1[%c0, %c0_0] : memref<8x192xbf16, #tpu.memory_space<vmem>>, vector<8x192xbf16>
    %c0_1 = arith.constant 0 : index
    %c0_2 = arith.constant 0 : index
    %1 = vector.load %arg2[%c0_1, %c0_2] : memref<192x128xbf16, #tpu.memory_space<vmem>>, vector<192x128xbf16>
    %cst = arith.constant dense<0.000000e+00> : vector<8x128xf32>
    %2 = tpu.matmul %0, %1, %cst {dimension_numbers = #tpu.dot_dimension_numbers<[1], [0], [0], [1], [0, 0, 1, 1], [], []>} : vector<8x192xbf16>, vector<192x128xbf16>, vector<8x128xf32> -> vector<8x128xf32>
    %c0_3 = arith.constant 0 : index
    %c0_4 = arith.constant 0 : index
    %3 = vector.load %arg3[%c0_3, %c0_4] : memref<1x128xf32, #tpu.memory_space<vmem>>, vector<1x128xf32>
    %4 = vector.broadcast %3 : vector<1x128xf32> to vector<8x128xf32>
    %5 = arith.addf %2, %4 : vector<8x128xf32>
    %c0_5 = arith.constant 0 : index
    %c0_6 = arith.constant 0 : index
    %6 = vector.load %arg4[%c0_5, %c0_6] : memref<8x128xf32, #tpu.memory_space<vmem>>, vector<8x128xf32>
    tpu.vector_store %arg4[%c0_5, %c0_6], %5 {strides = array<i32>} : memref<8x128xf32, #tpu.memory_space<vmem>>, vector<8x128xf32>,
    return
  }
  func.func @transform_0(%arg0: i32) -> (i32, i32) {
    %c0_i32 = arith.constant 0 : i32
    %c0_i32_0 = arith.constant 0 : i32
    return %arg0, %c0_i32 : i32, i32
  }
  func.func @transform_1(%arg0: i32) -> (i32, i32) {
    %c0_i32 = arith.constant 0 : i32
    %c0_i32_0 = arith.constant 0 : i32
    %c0_i32_1 = arith.constant 0 : i32
    return %c0_i32, %c0_i32_0 : i32, i32
  }
  func.func @transform_2(%arg0: i32) -> (i32, i32) {
    %c0_i32 = arith.constant 0 : i32
    %c0_i32_0 = arith.constant 0 : i32
    %c0_i32_1 = arith.constant 0 : i32
    return %c0_i32, %c0_i32_0 : i32, i32
  }
  func.func @transform_3(%arg0: i32) -> (i32, i32) {
    %c0_i32 = arith.constant 0 : i32
    %c0_i32_0 = arith.constant 0 : i32
    return %arg0, %c0_i32 : i32, i32
  }
}

</mosaic_0001>

<llo_original>
// kernel: tpu_custom_call.1
$region0: #{tpu_custom_call.1}
  #allocation0 [shape = 'u32[]', space=smem, size = 0x4, offset = 0x4, fixed_abs, tag = 'smem constant byte address 0x4 - core index']
  #allocation1 [shape = 'u32[144,128]{1,0:T(1,128)}', space=vmem, size = 0x12000, scoped, tag = 'internal scratch']
  %s0 = inlined_call_operand.hbm [shape: bf16[8,192], index: 0, kind: input, shape index: {}]
  %s1 = inlined_call_operand.hbm [shape: bf16[192,128], index: 1, kind: input, shape index: {}]
  %s2 = inlined_call_operand.vmem [shape: f32[1,128], index: 2, kind: input, shape index: {}]
  %s3 = inlined_call_operand.hbm [shape: f32[8,128], index: 3, kind: output, shape index: {}]
  %s4 = sld [smem:[#allocation0]]
  $region30: #{tpu_custom_call.1} parent=0
    _
  %s6 = ssub.s32 1, %s4
  %s7 = scalar_select 0, %s6, %s4
  $region1: #{tpu_custom_call.1} parent=0
    #allocation2 [shape = 'u8[4096]{0}', space=vmem, size = 0x1000, scoped, tag = 'input window, operand 0, single buffered']
    #allocation3 [shape = 's32[1]{0}', space=sflag, size = 0x4, scoped, tag = 'scoped memory for tpu_custom_call.1']
    #allocation4 [shape = 's32[1]{0}', space=sflag, size = 0x4, scoped, tag = 'scoped memory for tpu_custom_call.1']
    #allocation5 [shape = 'u8[49152]{0}', space=vmem, size = 0xc000, scoped, tag = 'input window, operand 1, single buffered']
    #allocation6 [shape = 's32[1]{0}', space=sflag, size = 0x4, scoped, tag = 'scoped memory for tpu_custom_call.1']
    #allocation7 [shape = 'u8[4096]{0}', space=vmem, size = 0x1000, scoped, tag = 'output window, operand 0, single buffered']
    %8 = vsyncpa [#allocation3], 0
    %9 = vsyncpa [#allocation6], 0
    %10 = vsyncpa [#allocation4], 0
    // Predicated region
    $region2: #{tpu_custom_call.1} parent=1 // pred_check
      _
    $region3: #{tpu_custom_call.1} parent=1 // pred_check_branch
      %12 = sbr.rel (0) target = $region5
    $region4: #{tpu_custom_call.1} parent=1 // pred_region
      %s14 = ssub.s32 128, 128
      %15 = vsyncadd [#allocation3], %s14
      %s17 = sshll.u32 [#allocation2], 4
      %s18 = int_to_ptr.vmem [resolvable:$true] %s17
      %20 = dma.hbm_to_vmem [thread:$0]  %s0, 128, %s18, [#allocation3]
    $region5: #{tpu_custom_call.1} parent=1 // pred_fallthru
      _
    // Predicated region
    $region6: #{tpu_custom_call.1} parent=1 // pred_check
      _
    $region7: #{tpu_custom_call.1} parent=1 // pred_check_branch
      %22 = sbr.rel (0) target = $region9
    $region8: #{tpu_custom_call.1} parent=1 // pred_region
      %s24 = ssub.s32 1536, 1536
      %25 = vsyncadd [#allocation6], %s24
      %s26 = sshll.u32 [#allocation5], 4
      %s27 = int_to_ptr.vmem [resolvable:$true] %s26
      %32 = dma.hbm_to_vmem [thread:$0]  %s1, 1536, %s27, [#allocation6], 64, 64, 4
    $region9: #{tpu_custom_call.1} parent=1 // pred_fallthru
      _
    // Predicated region
    $region10: #{tpu_custom_call.1} parent=1 // pred_check
      _
    $region11: #{tpu_custom_call.1} parent=1 // pred_check_branch
      %34 = sbr.rel (0) target = $region13
    $region12: #{tpu_custom_call.1} parent=1 // pred_region
      _
    $region13: #{tpu_custom_call.1} parent=1 // pred_fallthru
      _
    // Predicated region
    $region14: #{tpu_custom_call.1} parent=1 // pred_check
      _
    $region15: #{tpu_custom_call.1} parent=1 // pred_check_branch
      %36 = sbr.rel (0) target = $region17
    $region16: #{tpu_custom_call.1} parent=1 // pred_region
      %37 = dma.done [#allocation3], 128
    $region17: #{tpu_custom_call.1} parent=1 // pred_fallthru
      _
    // Predicated region
    $region18: #{tpu_custom_call.1} parent=1 // pred_check
      _
    $region19: #{tpu_custom_call.1} parent=1 // pred_check_branch
      %39 = sbr.rel (0) target = $region21
    $region20: #{tpu_custom_call.1} parent=1 // pred_region
      %40 = dma.done [#allocation6], 1536
    $region21: #{tpu_custom_call.1} parent=1 // pred_fallthru
      _
    %v42 = vld [vmem:[#allocation2] sm:$0xff]
    %v43 = vld [vmem:[#allocation5] sm:$0xf]
    %v44 = vld [vmem:[#allocation5 + $0x4] sm:$0xf]
    %v45 = vld [vmem:[#allocation5 + $0x8] sm:$0xf]
    %v46 = vld [vmem:[#allocation5 + $0xc] sm:$0xf]
    %v47 = vld [vmem:[#allocation5 + $0x10] sm:$0xf]
    %v48 = vld [vmem:[#allocation5 + $0x14] sm:$0xf]
    %v49 = vld [vmem:[#allocation5 + $0x18] sm:$0xf]
    %v50 = vld [vmem:[#allocation5 + $0x1c] sm:$0xf]
    %v51 = vld [vmem:[#allocation5 + $0x20] sm:$0xf]
    %v52 = vld [vmem:[#allocation5 + $0x24] sm:$0xf]
    %v53 = vld [vmem:[#allocation5 + $0x28] sm:$0xf]
    %v54 = vld [vmem:[#allocation5 + $0x2c] sm:$0xf]
    %v55 = vld [vmem:[#allocation5 + $0x30] sm:$0xf]
    %v56 = vld [vmem:[#allocation5 + $0x34] sm:$0xf]
    %v57 = vld [vmem:[#allocation5 + $0x38] sm:$0xf]
    %v58 = vld [vmem:[#allocation5 + $0x3c] sm:$0xf]
    %v59 = vld [vmem:[#allocation5 + $0x40] sm:$0xf]
    %v60 = vld [vmem:[#allocation5 + $0x44] sm:$0xf]
    %v61 = vld [vmem:[#allocation5 + $0x48] sm:$0xf]
    %v62 = vld [vmem:[#allocation5 + $0x4c] sm:$0xf]
    %v63 = vld [vmem:[#allocation5 + $0x50] sm:$0xf]
    %v64 = vld [vmem:[#allocation5 + $0x54] sm:$0xf]
    %v65 = vld [vmem:[#allocation5 + $0x58] sm:$0xf]
    %v66 = vld [vmem:[#allocation5 + $0x5c] sm:$0xf]
    %v67 = vld [vmem:[%s2] sm:$0x1]
    %v69 = vlaneseq
    %v70 = vshrl.u32 %v69, 7
    %v71 = vsub.s32 0, %v70
    %v72 = vrot.slane %v67, %v71
    %v75 = vunpack.c.l.b16 %v42
    %v76 = vunpack.c.h.b16 %v42
    %v77 = vpack.c.b16 %v75, %v75
    %v78 = vpack.c.b16 %v76, %v76
    %v104 = vunpack.c.l.b16 %v43
    %v105 = vunpack.c.l.b16 %v44
    %v106 = vunpack.c.l.b16 %v45
    %v107 = vunpack.c.l.b16 %v46
    %v108 = vunpack.c.l.b16 %v47
    %v109 = vunpack.c.l.b16 %v48
    %v110 = vunpack.c.l.b16 %v49
    %v111 = vunpack.c.l.b16 %v50
    %v112 = vunpack.c.l.b16 %v51
    %v113 = vunpack.c.l.b16 %v52
    %v114 = vunpack.c.l.b16 %v53
    %v115 = vunpack.c.l.b16 %v54
    %v116 = vunpack.c.l.b16 %v55
    %v117 = vunpack.c.l.b16 %v56
    %v118 = vunpack.c.l.b16 %v57
    %v119 = vunpack.c.l.b16 %v58
    %v120 = vunpack.c.l.b16 %v59
    %v121 = vunpack.c.l.b16 %v60
    %v122 = vunpack.c.l.b16 %v61
    %v123 = vunpack.c.l.b16 %v62
    %v124 = vunpack.c.l.b16 %v63
    %v125 = vunpack.c.l.b16 %v64
    %v126 = vunpack.c.l.b16 %v65
    %v127 = vunpack.c.l.b16 %v66
    %v128 = vpack.c.b16 %v105, %v104
    %v129 = vpack.c.b16 %v107, %v106
    %v130 = vpack.c.b16 %v109, %v108
    %v131 = vpack.c.b16 %v111, %v110
    %v132 = vpack.c.b16 %v113, %v112
    %v133 = vpack.c.b16 %v115, %v114
    %v134 = vpack.c.b16 %v117, %v116
    %v135 = vpack.c.b16 %v119, %v118
    %v136 = vpack.c.b16 %v121, %v120
    %v137 = vpack.c.b16 %v123, %v122
    %v138 = vpack.c.b16 %v125, %v124
    %v139 = vpack.c.b16 %v127, %v126
    %vm152 = vcmask 523264
    %v154 = vsel %vm152, %v78, 0
    %156 = vmatprep.subr.bf16.mxu0 0
    %157 = vmatpush1.bf16.msra.mxu0 %v135
    %158 = vmatprep.subr.bf16.mxu0 0
    %159 = vmatpush1.bf16.msra.mxu0 %v134
    %160 = vmatprep.subr.bf16.mxu0 0
    %161 = vmatpush1.bf16.msra.mxu0 %v133
    %162 = vmatprep.subr.bf16.mxu0 0
    %163 = vmatpush1.bf16.msra.mxu0 %v132
    %164 = vmatprep.subr.bf16.mxu0 0
    %165 = vmatpush1.bf16.msra.mxu0 %v131
    %166 = vmatprep.subr.bf16.mxu0 0
    %167 = vmatpush1.bf16.msra.mxu0 %v130
    %168 = vmatprep.subr.bf16.mxu0 0
    %169 = vmatpush1.bf16.msra.mxu0 %v129
    %170 = vmatprep.subr.bf16.mxu0 0
    %171 = vmatpush1.bf16.msra.mxu0 %v128
    %172 = vmatprep.subr.bf16.mxu0 0
    %173 = vmatpush2.bf16.msra.mxu0 0
    %174 = vmatprep.subr.bf16.mxu0 0
    %175 = vmatpush2.bf16.msra.mxu0 0
    %176 = vmatprep.subr.bf16.mxu0 0
    %177 = vmatpush2.bf16.msra.mxu0 0
    %178 = vmatprep.subr.bf16.mxu0 0
    %179 = vmatpush2.bf16.msra.mxu0 0
    %180 = vmatprep.subr.bf16.mxu0 0
    %181 = vmatpush2.bf16.msra.mxu0 %v139
    %182 = vmatprep.subr.bf16.mxu0 0
    %183 = vmatpush2.bf16.msra.mxu0 %v138
    %184 = vmatprep.subr.bf16.mxu0 0
    %185 = vmatpush2.bf16.msra.mxu0 %v137
    %186 = vmatprep.subr.bf16.mxu0 0
    %187 = vmatpush2.bf16.msra.mxu0 %v136
    %188 = vmatprep.mubr.bf16.mxu0 %v154
    %189 = vmatmul.mubr.bf16.gmra.mxu0 %v77
    %v190 = vpop.f32.mrf.mxu0
    %v191 = vadd.f32 %v72, %v190
    %v192 = vpop.f32.mrf.mxu0
    %v193 = vpop.f32.mrf.mxu0
    %v194 = vpop.f32.mrf.mxu0
    %195 = vdwg.mxu0
    %196 = vst [vmem:[#allocation7] sm:$0xff] %v191
    // Predicated region
    $region22: #{tpu_custom_call.1} parent=1 // pred_check
      _
    $region23: #{tpu_custom_call.1} parent=1 // pred_check_branch
      %198 = sbr.rel (0) target = $region25
    $region24: #{tpu_custom_call.1} parent=1 // pred_region
      %s200 = ssub.s32 128, 128
      %201 = vsyncadd [#allocation4], %s200
      %s203 = sshll.u32 [#allocation7], 4
      %s204 = int_to_ptr.vmem [resolvable:$true] %s203
      %206 = dma.vmem_to_hbm [thread:$0]  %s204, 128, %s3, [#allocation4]
    $region25: #{tpu_custom_call.1} parent=1 // pred_fallthru
      _
    // Predicated region
    $region26: #{tpu_custom_call.1} parent=1 // pred_check
      _
    $region27: #{tpu_custom_call.1} parent=1 // pred_check_branch
      %208 = sbr.rel (0) target = $region29
    $region28: #{tpu_custom_call.1} parent=1 // pred_region
      %209 = dma.done [#allocation4], 128
    $region29: #{tpu_custom_call.1} parent=1 // pred_fallthru
      _
    %210 = vsyncpa [#allocation3], 1
    %211 = vsyncpa [#allocation6], 1
    %212 = vsyncpa [#allocation4], 1

</llo_original>
